<compile_context>
chip_gen: v6e
topology: v6e:2x2x1
jax: 0.10.0
libtpu: 0.0.40
codegen_flags: <defaults>
</compile_context>

<pallas_src>
import functools
import math

import jax
import jax.numpy as jnp
from jax.experimental import pallas as pl
from jax.experimental.pallas import tpu as pltpu

# Keep XLA-side (reference / host-side weight composition) matmuls in full f32 so
# they agree with the in-kernel MXU f32 matmuls to ~1e-5.
jax.config.update("jax_default_matmul_precision", "highest")


# ---------------------------------------------------------------------------
# Kernels
# ---------------------------------------------------------------------------

def _linear_residual_kernel(x_ref, w_ref, b_ref, o_ref):
    # x_ref: (1, S, C); w_ref: (C, C) already transposed (y = x @ w); b_ref: (1, C)
    x = x_ref[0]
    y = jnp.dot(x, w_ref[...], preferred_element_type=jnp.float32) + b_ref[...]
    o_ref[0] = (x + y).astype(o_ref.dtype)


def _layernorm(x, w, b, eps=1e-5):
    mu = jnp.mean(x, axis=-1, keepdims=True)
    d = x - mu
    var = jnp.mean(d * d, axis=-1, keepdims=True)
    return d * jax.lax.rsqrt(var + eps) * w + b


def _transformer_layer_kernel(x_ref, ln1w_ref, ln1b_ref, wqkv_ref, bqkv_ref,
                              wo_ref, bo_ref, ln2w_ref, ln2b_ref, w1_ref, w2_ref,
                              o_ref, *, num_heads):
    x = x_ref[0]                       # (S, C) float32
    S, C = x.shape
    hd = C // num_heads
    scale = 1.0 / math.sqrt(hd)

    # ---- LN1 + fused QKV projection (external q/k/v composed with MHA in_proj) --
    x_ln = _layernorm(x, ln1w_ref[...], ln1b_ref[...])
    qkv = jnp.dot(x_ln, wqkv_ref[...],
                  preferred_element_type=jnp.float32) + bqkv_ref[...]     # (S, 3C)

    # ---- multi-head scaled-dot-product attention (static unrolled head loop) ---
    ctx = None
    for h in range(num_heads):
        q_h = qkv[:, h * hd:(h + 1) * hd] * scale               # (S, hd)
        k_h = qkv[:, C + h * hd:C + (h + 1) * hd]               # (S, hd)
        v_h = qkv[:, 2 * C + h * hd:2 * C + (h + 1) * hd]       # (S, hd)
        # scores = q_h @ k_h^T expressed as an NT dot (no in-kernel transpose).
        s = jax.lax.dot_general(q_h, k_h, (((1,), (1,)), ((), ())),
                                preferred_element_type=jnp.float32)        # (S, S)
        s = s - jnp.max(s, axis=-1, keepdims=True)
        p = jnp.exp(s)
        p = p / jnp.sum(p, axis=-1, keepdims=True)
        o_h = jnp.dot(p, v_h, preferred_element_type=jnp.float32)          # (S, hd)
        # out_proj applied per head slice and accumulated: equivalent to
        # concat(heads) @ W_out without a lane-concatenate relayout.
        part = jnp.dot(o_h, wo_ref[h * hd:(h + 1) * hd, :],
                       preferred_element_type=jnp.float32)                 # (S, C)
        ctx = part if ctx is None else ctx + part

    x = x + ctx + bo_ref[...]          # residual 1 (dropout = identity in eval)

    # ---- LN2 + MLP (fc1 -> ReLU -> fc2) + residual 2 ----------------------------
    x_ln2 = _layernorm(x, ln2w_ref[...], ln2b_ref[...])
    hmid = jnp.maximum(
        jnp.dot(x_ln2, w1_ref[...], preferred_element_type=jnp.float32), 0.0)
    mlp = jnp.dot(hmid, w2_ref[...], preferred_element_type=jnp.float32)
    o_ref[0] = (x + mlp).astype(o_ref.dtype)


# ---------------------------------------------------------------------------
# pallas_call wrappers
# ---------------------------------------------------------------------------

def _weight_spec(arr):
    zeros = (0,) * arr.ndim
    return pl.BlockSpec(tuple(arr.shape), lambda b, _z=zeros: _z)


def _linear_residual(p, w_t, b2d):
    B, S, C = p.shape
    grid_spec = pltpu.PrefetchScalarGridSpec(
        num_scalar_prefetch=0,
        grid=(B,),
        in_specs=[
            pl.BlockSpec((1, S, C), lambda b: (b, 0, 0)),
            _weight_spec(w_t),
            _weight_spec(b2d),
        ],
        out_specs=pl.BlockSpec((1, S, C), lambda b: (b, 0, 0)),
    )
    return pl.pallas_call(
        _linear_residual_kernel,
        out_shape=jax.ShapeDtypeStruct((B, S, C), p.dtype),
        grid_spec=grid_spec,
        compiler_params=pltpu.CompilerParams(
            dimension_semantics=("parallel",),
            vmem_limit_bytes=32 * 1024 * 1024),
    )(p, w_t, b2d)


def _transformer_layer(p, ln1w, ln1b, wqkv, bqkv, wo, bo, ln2w, ln2b, w1, w2,
                       *, num_heads):
    B, S, C = p.shape
    weights = (ln1w, ln1b, wqkv, bqkv, wo, bo, ln2w, ln2b, w1, w2)
    grid_spec = pltpu.PrefetchScalarGridSpec(
        num_scalar_prefetch=0,
        grid=(B,),
        in_specs=[pl.BlockSpec((1, S, C), lambda b: (b, 0, 0))]
                + [_weight_spec(w) for w in weights],
        out_specs=pl.BlockSpec((1, S, C), lambda b: (b, 0, 0)),
    )
    return pl.pallas_call(
        functools.partial(_transformer_layer_kernel, num_heads=num_heads),
        out_shape=jax.ShapeDtypeStruct((B, S, C), p.dtype),
        grid_spec=grid_spec,
        compiler_params=pltpu.CompilerParams(
            dimension_semantics=("parallel",),
            vmem_limit_bytes=32 * 1024 * 1024),
    )(p, *weights)


def transformer_block(x_nchw, params, num_heads):
    """TransformerBlock forward (c1 == c2 path; eval-mode dropout)."""
    # TODO(synk): the optional Conv(c1, c2) (1x1 conv + BN + SiLU) branch used
    # when c1 != c2 is not exercised here (test uses c1 == c2, so conv is None).
    B, C, W, H = x_nchw.shape
    S = W * H
    # PyTorch builds p with shape (S, B, C); we use the batch-major permutation
    # (B, S, C) — per-element math is identical, layout is TPU-friendly.
    p = jnp.transpose(x_nchw.reshape(B, C, S), (0, 2, 1))
    p = _linear_residual(p, params["lin_w"].T, params["lin_b"].reshape(1, C))

    for lp in params["layers"]:
        # Compose external q/k/v linears with MultiheadAttention's in_proj into a
        # single fused (C, 3C) weight (host-side, tiny static matmuls).
        w_in = lp["in_w"]
        wq_c = w_in[:C] @ lp["wq"]          # composed, PyTorch (out, in) layout
        wk_c = w_in[C:2 * C] @ lp["wk"]
        wv_c = w_in[2 * C:] @ lp["wv"]
        wqkv = jnp.concatenate([wq_c, wk_c, wv_c], axis=0).T      # (C, 3C)
        p = _transformer_layer(
            p,
            lp["ln1_w"].reshape(1, C), lp["ln1_b"].reshape(1, C),
            wqkv, lp["in_b"].reshape(1, 3 * C),
            lp["out_w"].T, lp["out_b"].reshape(1, C),
            lp["ln2_w"].reshape(1, C), lp["ln2_b"].reshape(1, C),
            lp["fc1_w"].T, lp["fc2_w"].T,
            num_heads=num_heads)

    return jnp.transpose(p, (0, 2, 1)).reshape(B, C, W, H)


# ---------------------------------------------------------------------------
# Pure-JAX reference (mirrors the PyTorch module op-for-op, eval mode)
# ---------------------------------------------------------------------------

def transformer_block_ref(x_nchw, params, num_heads):
    B, C, W, H = x_nchw.shape
    S = W * H
    hd = C // num_heads
    p = jnp.transpose(x_nchw.reshape(B, C, S), (0, 2, 1))       # (B, S, C)
    p = p + p @ params["lin_w"].T + params["lin_b"]

    def ln(v, w, b, eps=1e-5):
        mu = jnp.mean(v, axis=-1, keepdims=True)
        var = jnp.mean((v - mu) ** 2, axis=-1, keepdims=True)
        return (v - mu) / jnp.sqrt(var + eps) * w + b

    for lp in params["layers"]:
        x = p
        x_ = ln(x, lp["ln1_w"], lp["ln1_b"])
        q = x_ @ lp["wq"].T
        k = x_ @ lp["wk"].T
        v = x_ @ lp["wv"].T
        wq_in, wk_in, wv_in = jnp.split(lp["in_w"], 3, axis=0)
        bq, bk, bv = jnp.split(lp["in_b"], 3)
        q = q @ wq_in.T + bq
        k = k @ wk_in.T + bk
        v = v @ wv_in.T + bv
        qh = q.reshape(B, S, num_heads, hd).transpose(0, 2, 1, 3)
        kh = k.reshape(B, S, num_heads, hd).transpose(0, 2, 1, 3)
        vh = v.reshape(B, S, num_heads, hd).transpose(0, 2, 1, 3)
        scores = jnp.einsum("bhqd,bhkd->bhqk", qh, kh) / math.sqrt(hd)
        attn = jax.nn.softmax(scores, axis=-1)
        ctx = jnp.einsum("bhqk,bhkd->bhqd", attn, vh)
        ctx = ctx.transpose(0, 2, 1, 3).reshape(B, S, C)
        ctx = ctx @ lp["out_w"].T + lp["out_b"]
        x = ctx + x
        x_ = ln(x, lp["ln2_w"], lp["ln2_b"])
        x_ = jnp.maximum(x_ @ lp["fc1_w"].T, 0.0) @ lp["fc2_w"].T
        p = x + x_

    return jnp.transpose(p, (0, 2, 1)).reshape(B, C, W, H)


# ---------------------------------------------------------------------------
# Deterministic synthetic parameters + test
# ---------------------------------------------------------------------------

def _init_params(key, C, num_layers):
    k_lin, *k_layers = jax.random.split(key, num_layers + 1)
    kw, kb = jax.random.split(k_lin)
    params = {
        "lin_w": jax.random.normal(kw, (C, C), jnp.float32) / math.sqrt(C),
        "lin_b": 0.1 * jax.random.normal(kb, (C,), jnp.float32),
        "layers": [],
    }
    for kl in k_layers:
        ks = jax.random.split(kl, 13)
        params["layers"].append({
            "ln1_w": 1.0 + 0.1 * jax.random.normal(ks[0], (C,), jnp.float32),
            "ln1_b": 0.1 * jax.random.normal(ks[1], (C,), jnp.float32),
            "wq": jax.random.normal(ks[2], (C, C), jnp.float32) / math.sqrt(C),
            "wk": jax.random.normal(ks[3], (C, C), jnp.float32) / math.sqrt(C),
            "wv": jax.random.normal(ks[4], (C, C), jnp.float32) / math.sqrt(C),
            "in_w": jax.random.normal(ks[5], (3 * C, C), jnp.float32) / math.sqrt(C),
            "in_b": 0.1 * jax.random.normal(ks[6], (3 * C,), jnp.float32),
            "out_w": jax.random.normal(ks[7], (C, C), jnp.float32) / math.sqrt(C),
            "out_b": 0.1 * jax.random.normal(ks[8], (C,), jnp.float32),
            "ln2_w": 1.0 + 0.1 * jax.random.normal(ks[9], (C,), jnp.float32),
            "ln2_b": 0.1 * jax.random.normal(ks[10], (C,), jnp.float32),
            "fc1_w": jax.random.normal(ks[11], (4 * C, C), jnp.float32) / math.sqrt(C),
            "fc2_w": jax.random.normal(ks[12], (C, 4 * C), jnp.float32) / math.sqrt(4 * C),
        })
    return params


if __name__ == "__main__":
    # TransformerBlock(c1=c2=32, num_heads=4, num_layers=2); x: (2, 32, 4, 4)
    B, C, W, H = 2, 32, 4, 4
    num_heads, num_layers = 4, 2

    key = jax.random.PRNGKey(0)
    kx, kp = jax.random.split(key)
    x = jax.random.normal(kx, (B, C, W, H), dtype=jnp.float32)
    params = _init_params(kp, C, num_layers)

    out = transformer_block(x, params, num_heads)
    out = jax.block_until_ready(out)

    ref = transformer_block_ref(x, params, num_heads)
    assert out.shape == (B, C, W, H), out.shape
    max_err = float(jnp.max(jnp.abs(out - ref)))
    assert jnp.allclose(out, ref, atol=1e-3, rtol=1e-3), f"mismatch: {max_err}"

    print("KERNEL_OK")
</pallas_src>

<mosaic_0001>
module attributes {stable_mosaic.version = 11 : i64} {
  func.func @_linear_residual_kernel(%arg0: i32, %arg1: memref<1x16x32xf32, #tpu.memory_space<vmem>>, %arg2: memref<32x32xf32, #tpu.memory_space<vmem>>, %arg3: memref<1x32xf32, #tpu.memory_space<vmem>>, %arg4: memref<1x16x32xf32, #tpu.memory_space<vmem>>) attributes {dimension_semantics = [#tpu.dimension_semantics<parallel>], iteration_bounds = array<i64: 2>, scalar_prefetch = 0 : i64, scratch_operands = 0 : i64, tpu.core_type = #tpu.core_type<tc>, window_params = [{transform_indices = @transform_0, window_bounds = array<i64: 1, 16, 32>}, {pipeline_mode = #tpu.pipeline_mode<synchronous>, transform_indices = @transform_1, window_bounds = array<i64: 32, 32>}, {pipeline_mode = #tpu.pipeline_mode<synchronous>, transform_indices = @transform_2, window_bounds = array<i64: 1, 32>}, {transform_indices = @transform_3, window_bounds = array<i64: 1, 16, 32>}]} {
    %c0 = arith.constant 0 : index
    %c0_0 = arith.constant 0 : index
    %c0_1 = arith.constant 0 : index
    %0 = vector.load %arg1[%c0, %c0_0, %c0_1] : memref<1x16x32xf32, #tpu.memory_space<vmem>>, vector<1x16x32xf32>
    %1 = vector.shape_cast %0 : vector<1x16x32xf32> to vector<16x32xf32>
    %c0_2 = arith.constant 0 : index
    %c0_3 = arith.constant 0 : index
    %2 = vector.load %arg2[%c0_2, %c0_3] : memref<32x32xf32, #tpu.memory_space<vmem>>, vector<32x32xf32>
    %cst = arith.constant dense<0.000000e+00> : vector<16x32xf32>
    %3 = tpu.matmul %1, %2, %cst {dimension_numbers = #tpu.dot_dimension_numbers<[1], [0], [0], [1], [0, 0, 1, 1], [], []>, precision = #tpu.contract_precision<fp32>} : vector<16x32xf32>, vector<32x32xf32>, vector<16x32xf32> -> vector<16x32xf32>
    %c0_4 = arith.constant 0 : index
    %c0_5 = arith.constant 0 : index
    %4 = vector.load %arg3[%c0_4, %c0_5] : memref<1x32xf32, #tpu.memory_space<vmem>>, vector<1x32xf32>
    %5 = vector.broadcast %4 : vector<1x32xf32> to vector<16x32xf32>
    %6 = arith.addf %3, %5 : vector<16x32xf32>
    %7 = arith.addf %1, %6 : vector<16x32xf32>
    %c0_6 = arith.constant 0 : index
    %c0_7 = arith.constant 0 : index
    %c0_8 = arith.constant 0 : index
    %8 = vector.load %arg4[%c0_6, %c0_7, %c0_8] : memref<1x16x32xf32, #tpu.memory_space<vmem>>, vector<1x16x32xf32>
    %9 = vector.shape_cast %8 : vector<1x16x32xf32> to vector<16x32xf32>
    %10 = vector.shape_cast %7 : vector<16x32xf32> to vector<1x16x32xf32>
    tpu.vector_store %arg4[%c0_6, %c0_7, %c0_8], %10 {strides = array<i32>} : memref<1x16x32xf32, #tpu.memory_space<vmem>>, vector<1x16x32xf32>,
    return
  }
  func.func @transform_0(%arg0: i32) -> (i32, i32, i32) {
    %c0_i32 = arith.constant 0 : i32
    %c0_i32_0 = arith.constant 0 : i32
    %c0_i32_1 = arith.constant 0 : i32
    return %arg0, %c0_i32, %c0_i32_0 : i32, i32, i32
  }
  func.func @transform_1(%arg0: i32) -> (i32, i32) {
    %c0_i32 = arith.constant 0 : i32
    %c0_i32_0 = arith.constant 0 : i32
    %c0_i32_1 = arith.constant 0 : i32
    return %c0_i32, %c0_i32_0 : i32, i32
  }
  func.func @transform_2(%arg0: i32) -> (i32, i32) {
    %c0_i32 = arith.constant 0 : i32
    %c0_i32_0 = arith.constant 0 : i32
    %c0_i32_1 = arith.constant 0 : i32
    return %c0_i32, %c0_i32_0 : i32, i32
  }
  func.func @transform_3(%arg0: i32) -> (i32, i32, i32) {
    %c0_i32 = arith.constant 0 : i32
    %c0_i32_0 = arith.constant 0 : i32
    %c0_i32_1 = arith.constant 0 : i32
    return %arg0, %c0_i32, %c0_i32_0 : i32, i32, i32
  }
}

</mosaic_0001>

<llo_original>
// kernel: tpu_custom_call.1
$region0: #{tpu_custom_call.1}
  #allocation0 [shape = 'u32[]', space=smem, size = 0x4, offset = 0x4, fixed_abs, tag = 'smem constant byte address 0x4 - core index']
  #allocation1 [shape = 'u32[144,128]{1,0:T(1,128)}', space=vmem, size = 0x12000, scoped, tag = 'internal scratch']
  %s0 = inlined_call_operand.hbm [shape: f32[2,16,32], index: 0, kind: input, shape index: {}]
  %s1 = inlined_call_operand.hbm [shape: f32[32,32], index: 1, kind: input, shape index: {}]
  %s2 = inlined_call_operand.vmem [shape: f32[1,32], index: 2, kind: input, shape index: {}]
  %s3 = inlined_call_operand.hbm [shape: f32[2,16,32], index: 3, kind: output, shape index: {}]
  %s4 = sld [smem:[#allocation0]]
  $region53: #{tpu_custom_call.1} parent=0
    _
  %s6 = ssub.s32 1, %s4
  %s7 = scalar_select 0, %s6, %s4
  $region1: #{tpu_custom_call.1} parent=0
    #allocation2 [shape = 'u8[16384]{0}', space=vmem, size = 0x4000, scoped, tag = 'input window, operand 0']
    #allocation3 [shape = 's32[2]{0}', space=sflag, size = 0x8, scoped, tag = 'scoped memory for tpu_custom_call.1']
    #allocation4 [shape = 's32[2]{0}', space=sflag, size = 0x8, scoped, tag = 'scoped memory for tpu_custom_call.1']
    #allocation5 [shape = 'u8[16384]{0}', space=vmem, size = 0x4000, scoped, tag = 'input window, operand 1, single buffered']
    #allocation6 [shape = 's32[1]{0}', space=sflag, size = 0x4, scoped, tag = 'scoped memory for tpu_custom_call.1']
    #allocation7 [shape = 'u8[16384]{0}', space=vmem, size = 0x4000, scoped, tag = 'output window, operand 0']
    %8 = vsyncpa [#allocation3], 0
    %s9 = scalar_lea.sflag [#allocation3], 1
    %10 = vsyncpa %s9, 0
    %11 = vsyncpa [#allocation6], 0
    %12 = vsyncpa [#allocation4], 0
    %s13 = scalar_lea.sflag [#allocation4], 1
    %14 = vsyncpa %s13, 0
    loop: start=0, step=1, limit=4
    $region2: #{tpu_custom_call.1} parent=1 // loop_pre_header
      _
    $region3: #{tpu_custom_call.1} parent=1 // loop_header
      %s16 = sphi 0, %s20
      %p17 = scmp.ge.s32.totalorder %s16, 4
      %s26 = sphi 0, %s28
      %s29 = sphi 0, %s26
      %s30 = sphi 0, %s29
      %s46 = sphi 0, %s30
      %s50 = sphi 0, %s50
      %s52 = sphi 0, %s50
      %s53 = sphi 0, %s52
      %s67 = sphi 0, %s53
      %s71 = sphi 0, %s71
      %s73 = sphi 0, %s71
      %s74 = sphi 0, %s73
      %s88 = sphi 0, %s74
      %s94 = sphi 0, %s96
      %s97 = sphi 0, %s94
      %s98 = sphi 0, %s97
      %s114 = sphi 0, %s98
    $region4: #{tpu_custom_call.1} parent=1 // loop_header_branch
      %19 = sbr.rel (%p17) target = $region8
    $region5: #{tpu_custom_call.1} parent=1 // loop_body
      %s21 = ssub.s32 %s16, 1
      %s22 = ssub.s32 %s16, 2
      %s23 = sadd.s32 %s16, 1
      %s24 = ssub.s32 %s16, %s23
      %p25 = scmp.eq.s32.totalorder %s24, 0
      %s27 = sadd.s32 %s26, 1
      %s28 = scalar_select %p25, %s26, %s27
      %p31 = pneg %p25
      %p32 = scmp.eq.s32.totalorder %s16, 1
      %p33 = por %p31, %p32
      %p34 = scmp.ne.s32.totalorder %s26, %s29
      %p35 = scmp.eq.s32.totalorder %s16, 0
      %p36 = por %p34, %p35
      %p37 = scmp.ne.s32.totalorder %s26, %s29
      %p38 = scmp.eq.s32.totalorder %s21, 1
      %p39 = por %p37, %p38
      %p40 = scmp.ne.s32.totalorder %s29, %s30
      %p41 = scmp.eq.s32.totalorder %s21, 0
      %p42 = por %p40, %p41
      %p43 = scmp.ne.s32.totalorder %s29, %s30
      %p44 = scmp.eq.s32.totalorder %s22, 1
      %p45 = por %p43, %p44
      %p47 = scmp.ne.s32.totalorder %s30, %s46
      %p48 = scmp.eq.s32.totalorder %s22, 0
      %p49 = por %p47, %p48
      %s51 = sadd.s32 %s50, 1
      %p54 = scmp.eq.s32.totalorder %s16, 1
      %p55 = scmp.ne.s32.totalorder %s50, %s52
      %p56 = scmp.eq.s32.totalorder %s16, 0
      %p57 = por %p55, %p56
      %p58 = scmp.ne.s32.totalorder %s50, %s52
      %p59 = scmp.eq.s32.totalorder %s21, 1
      %p60 = por %p58, %p59
      %p61 = scmp.ne.s32.totalorder %s52, %s53
      %p62 = scmp.eq.s32.totalorder %s21, 0
      %p63 = por %p61, %p62
      %p64 = scmp.ne.s32.totalorder %s52, %s53
      %p65 = scmp.eq.s32.totalorder %s22, 1
      %p66 = por %p64, %p65
      %p68 = scmp.ne.s32.totalorder %s53, %s67
      %p69 = scmp.eq.s32.totalorder %s22, 0
      %p70 = por %p68, %p69
      %s72 = sadd.s32 %s71, 1
      %p75 = scmp.eq.s32.totalorder %s16, 1
      %p76 = scmp.ne.s32.totalorder %s71, %s73
      %p77 = scmp.eq.s32.totalorder %s16, 0
      %p78 = por %p76, %p77
      %p79 = scmp.ne.s32.totalorder %s71, %s73
      %p80 = scmp.eq.s32.totalorder %s21, 1
      %p81 = por %p79, %p80
      %p82 = scmp.ne.s32.totalorder %s73, %s74
      %p83 = scmp.eq.s32.totalorder %s21, 0
      %p84 = por %p82, %p83
      %p85 = scmp.ne.s32.totalorder %s73, %s74
      %p86 = scmp.eq.s32.totalorder %s22, 1
      %p87 = por %p85, %p86
      %p89 = scmp.ne.s32.totalorder %s74, %s88
      %p90 = scmp.eq.s32.totalorder %s22, 0
      %p91 = por %p89, %p90
      %s92 = ssub.s32 %s16, %s23
      %p93 = scmp.eq.s32.totalorder %s92, 0
      %s95 = sadd.s32 %s94, 1
      %s96 = scalar_select %p93, %s94, %s95
      %p99 = pneg %p93
      %p100 = scmp.eq.s32.totalorder %s16, 1
      %p101 = por %p99, %p100
      %p102 = scmp.ne.s32.totalorder %s94, %s97
      %p103 = scmp.eq.s32.totalorder %s16, 0
      %p104 = por %p102, %p103
      %p105 = scmp.ne.s32.totalorder %s94, %s97
      %p106 = scmp.eq.s32.totalorder %s21, 1
      %p107 = por %p105, %p106
      %p108 = scmp.ne.s32.totalorder %s97, %s98
      %p109 = scmp.eq.s32.totalorder %s21, 0
      %p110 = por %p108, %p109
      %p111 = scmp.ne.s32.totalorder %s97, %s98
      %p112 = scmp.eq.s32.totalorder %s22, 1
      %p113 = por %p111, %p112
      %p115 = scmp.ne.s32.totalorder %s98, %s114
      %p116 = scmp.eq.s32.totalorder %s22, 0
      %p117 = por %p115, %p116
      %p118 = scmp.le.s32.totalorder 1, %s16
      %p119 = scmp.lt.s32.totalorder %s16, 3
      %p120 = pnand %p118, %p119
      %p121 = pneg %p120
      // Predicated region
      $region9: #{tpu_custom_call.1} parent=5 // pred_check
        _
      $region10: #{tpu_custom_call.1} parent=5 // pred_check_branch
        %123 = sbr.rel (%p120) target = $region12
      $region11: #{tpu_custom_call.1} parent=5 // pred_region
        %s124 = ssub.s32 %s16, 1
        // Predicated region
        $region13: #{tpu_custom_call.1} parent=11 // pred_check
          %p125 = pneg %p63
        $region14: #{tpu_custom_call.1} parent=11 // pred_check_branch
          %127 = sbr.rel (%p125) target = $region16
        $region15: #{tpu_custom_call.1} parent=11 // pred_region
          %s129 = ssub.s32 512, 512
          %130 = vsyncadd [#allocation6], %s129
          %s131 = sshll.u32 [#allocation5], 4
          %s132 = int_to_ptr.vmem [resolvable:$true] %s131
          %137 = dma.hbm_to_vmem [thread:$0]  %s1, 512, %s132, [#allocation6], 128, 128, 8
        $region16: #{tpu_custom_call.1} parent=11 // pred_fallthru
          _
        // Predicated region
        $region17: #{tpu_custom_call.1} parent=11 // pred_check
          %p138 = pneg %p84
        $region18: #{tpu_custom_call.1} parent=11 // pred_check_branch
          %140 = sbr.rel (%p138) target = $region20
        $region19: #{tpu_custom_call.1} parent=11 // pred_region
          _
        $region20: #{tpu_custom_call.1} parent=11 // pred_fallthru
          _
      $region12: #{tpu_custom_call.1} parent=5 // pred_fallthru
        _
      %p141 = scmp.lt.s32.totalorder %s16, 2
      // Predicated region
      $region21: #{tpu_custom_call.1} parent=5 // pred_check
        %p142 = pneg %p141
      $region22: #{tpu_custom_call.1} parent=5 // pred_check_branch
        %144 = sbr.rel (%p142) target = $region24
      $region23: #{tpu_custom_call.1} parent=5 // pred_region
        // Predicated region
        $region25: #{tpu_custom_call.1} parent=23 // pred_check
          %p145 = pneg %p36
        $region26: #{tpu_custom_call.1} parent=23 // pred_check_branch
          %147 = sbr.rel (%p145) target = $region28
        $region27: #{tpu_custom_call.1} parent=23 // pred_region
          %s148 = sand.u32 %s26, 1
          %s149 = scalar_lea.sflag [#allocation3], %s148
          %s150 = sand.u32 %s26, 1
          %s151 = smul.addr %s150, 16
          %s152 = scalar_lea.vmem [#allocation2], %s151
          %s154 = ssub.s32 256, 256
          %155 = vsyncadd %s149, %s154
          %s156 = smul.addr %s16, 2
          %s157 = smul.addr %s156, 128
          %s158 = scalar_lea.hbm %s0, %s157
          %s159 = sshll.u32 %s152, 4
          %s160 = int_to_ptr.vmem [resolvable:$true] %s159
          %165 = dma.hbm_to_vmem [thread:$0]  %s158, 256, %s160, %s149, 128, 128, 8
        $region28: #{tpu_custom_call.1} parent=23 // pred_fallthru
          _
      $region24: #{tpu_custom_call.1} parent=5 // pred_fallthru
        _
      %p166 = scmp.le.s32.totalorder 1, %s16
      %p167 = scmp.lt.s32.totalorder %s16, 3
      %p168 = pnand %p166, %p167
      %p169 = pneg %p168
      // Predicated region
      $region29: #{tpu_custom_call.1} parent=5 // pred_check
        _
      $region30: #{tpu_custom_call.1} parent=5 // pred_check_branch
        %171 = sbr.rel (%p168) target = $region32
      $region31: #{tpu_custom_call.1} parent=5 // pred_region
        %s172 = ssub.s32 %s16, 1
        %s173 = sand.u32 %s29, 1
        %s174 = scalar_lea.sflag [#allocation3], %s173
        %s175 = sand.u32 %s29, 1
        %s176 = smul.addr %s175, 16
        %s177 = scalar_lea.vmem [#allocation2], %s176
        // Predicated region
        $region33: #{tpu_custom_call.1} parent=31 // pred_check
          %p178 = pneg %p42
        $region34: #{tpu_custom_call.1} parent=31 // pred_check_branch
          %180 = sbr.rel (%p178) target = $region36
        $region35: #{tpu_custom_call.1} parent=31 // pred_region
          %181 = dma.done %s174, 256
        $region36: #{tpu_custom_call.1} parent=31 // pred_fallthru
          _
        // Predicated region
        $region37: #{tpu_custom_call.1} parent=31 // pred_check
          %p182 = pneg %p63
        $region38: #{tpu_custom_call.1} parent=31 // pred_check_branch
          %184 = sbr.rel (%p182) target = $region40
        $region39: #{tpu_custom_call.1} parent=31 // pred_region
          %185 = dma.done [#allocation6], 512
        $region40: #{tpu_custom_call.1} parent=31 // pred_fallthru
          _
        %s186 = sand.u32 %s29, 1
        %s187 = scalar_lea.sflag [#allocation3], %s186
        %s188 = sand.u32 %s29, 1
        %s189 = smul.addr %s188, 16
        %s190 = scalar_lea.vmem [#allocation2], %s189
        %p191 = pneg %p42
        %p192 = pneg %p39
        %p193 = pneg %p63
        %p194 = pneg %p60
        %p195 = pneg %p84
        %p196 = pneg %p81
        %p197 = pneg %p110
        %p198 = pneg %p107
        %s199 = sand.u32 %s97, 1
        %s200 = scalar_lea.sflag [#allocation4], %s199
        %s201 = sand.u32 %s97, 1
        %s202 = smul.addr %s201, 16
        %s203 = scalar_lea.vmem [#allocation7], %s202
        %v204 = vld [vmem:[%s177] sm:$0xff]
        %v205 = vld [vmem:[%s177 + $0x8] sm:$0xff]
        %v206 = vld [vmem:[#allocation5] sm:$0xff]
        %v207 = vld [vmem:[#allocation5 + $0x8] sm:$0xff]
        %v208 = vld [vmem:[#allocation5 + $0x10] sm:$0xff]
        %v209 = vld [vmem:[#allocation5 + $0x18] sm:$0xff]
        %v210 = vld [vmem:[%s2] sm:$0x1]
        %v212 = vlaneseq
        %v213 = vshrl.u32 %v212, 7
        %v214 = vsub.s32 0, %v213
        %v215 = vrot.slane %v210, %v214
        %vm217 = vcmask 261120
        %v219 = vsel %vm217, %v204, 0
        %v222 = vsel %vm217, %v205, 0
        %224 = vmatprep.subr.mxu0 0.0
        %225 = vmatpush1.msra.mxu0 0.0
        %226 = vmatprep.subr.mxu0 0.0
        %227 = vmatpush1.msra.mxu0 0.0
        %228 = vmatprep.subr.mxu0 0.0
        %229 = vmatpush1.msra.mxu0 0.0
        %230 = vmatprep.subr.mxu0 0.0
        %231 = vmatpush1.msra.mxu0 0.0
        %232 = vmatprep.subr.mxu0 0.0
        %233 = vmatpush1.msra.mxu0 0.0
        %234 = vmatprep.subr.mxu0 0.0
        %235 = vmatpush1.msra.mxu0 0.0
        %236 = vmatprep.subr.mxu0 0.0
        %237 = vmatpush1.msra.mxu0 0.0
        %238 = vmatprep.subr.mxu0 0.0
        %239 = vmatpush1.msra.mxu0 0.0
        %240 = vmatprep.subr.mxu0 0.0
        %241 = vmatpush1.msra.mxu0 0.0
        %242 = vmatprep.subr.mxu0 0.0
        %243 = vmatpush1.msra.mxu0 0.0
        %244 = vmatprep.subr.mxu0 0.0
        %245 = vmatpush1.msra.mxu0 0.0
        %246 = vmatprep.subr.mxu0 0.0
        %247 = vmatpush1.msra.mxu0 0.0
        %248 = vmatprep.subr.mxu0 0.0
        %v249 = vand.u32 %v209, 4294901760
        %250 = vmatpush1.msra.mxu0 %v249
        %251 = vmatprep.subr.mxu0 0.0
        %v252 = vand.u32 %v208, 4294901760
        %253 = vmatpush1.msra.mxu0 %v252
        %254 = vmatprep.subr.mxu0 0.0
        %v255 = vand.u32 %v207, 4294901760
        %256 = vmatpush1.msra.mxu0 %v255
        %257 = vmatprep.subr.mxu0 0.0
        %v258 = vand.u32 %v206, 4294901760
        %259 = vmatpush1.msra.mxu0 %v258
        %260 = vmatprep.subr.mxu0 0.0
        %261 = vmatpush2.msra.mxu0 0.0
        %262 = vmatprep.subr.mxu0 0.0
        %263 = vmatpush2.msra.mxu0 0.0
        %264 = vmatprep.subr.mxu0 0.0
        %265 = vmatpush2.msra.mxu0 0.0
        %266 = vmatprep.subr.mxu0 0.0
        %267 = vmatpush2.msra.mxu0 0.0
        %268 = vmatprep.subr.mxu0 0.0
        %269 = vmatpush2.msra.mxu0 0.0
        %270 = vmatprep.subr.mxu0 0.0
        %271 = vmatpush2.msra.mxu0 0.0
        %272 = vmatprep.subr.mxu0 0.0
        %273 = vmatpush2.msra.mxu0 0.0
        %274 = vmatprep.subr.mxu0 0.0
        %275 = vmatpush2.msra.mxu0 0.0
        %276 = vmatprep.subr.mxu0 0.0
        %277 = vmatpush2.msra.mxu0 0.0
        %278 = vmatprep.subr.mxu0 0.0
        %279 = vmatpush2.msra.mxu0 0.0
        %280 = vmatprep.subr.mxu0 0.0
        %281 = vmatpush2.msra.mxu0 0.0
        %282 = vmatprep.subr.mxu0 0.0
        %283 = vmatpush2.msra.mxu0 0.0
        %284 = vmatprep.subr.mxu0 0.0
        %285 = vmatpush2.msra.mxu0 0.0
        %286 = vmatprep.subr.mxu0 0.0
        %287 = vmatpush2.msra.mxu0 0.0
        %288 = vmatprep.subr.mxu0 0.0
        %289 = vmatpush2.msra.mxu0 0.0
        %290 = vmatprep.subr.mxu0 0.0
        %291 = vmatpush2.msra.mxu0 0.0
        %292 = vmatprep.mubr.f32.mxu0 0.0
        %v293 = vand.u32 %v219, 4294901760
        %v294 = vsub.f32 %v219, %v293
        %v295 = vand.u32 %v294, 4294901760
        %v296 = vsub.f32 %v294, %v295
        %v297 = vand.u32 %v296, 4294901760
        %298 = vmatmul.mubr.f32.gmra.mxu0 %v297
        %v299 = vpop.f32.mrf.mxu0
        %v300 = vadd.f32 %v215, %v299
        %v301 = vpop.f32.mrf.mxu0
        %302 = vmatprep.mubr.f32.mxu0 0.0
        %v303 = vand.u32 %v222, 4294901760
        %v304 = vsub.f32 %v222, %v303
        %v305 = vand.u32 %v304, 4294901760
        %v306 = vsub.f32 %v304, %v305
        %v307 = vand.u32 %v306, 4294901760
        %308 = vmatmul.mubr.f32.gmra.mxu0 %v307
        %v309 = vpop.f32.mrf.mxu0
        %v310 = vadd.f32 %v215, %v309
        %v311 = vpop.f32.mrf.mxu0
        %312 = vdwg.mxu0
        %313 = vmatprep.subr.mxu0 0.0
        %314 = vmatpush1.msra.mxu0 0.0
        %315 = vmatprep.subr.mxu0 0.0
        %316 = vmatpush1.msra.mxu0 0.0
        %317 = vmatprep.subr.mxu0 0.0
        %318 = vmatpush1.msra.mxu0 0.0
        %319 = vmatprep.subr.mxu0 0.0
        %320 = vmatpush1.msra.mxu0 0.0
        %321 = vmatprep.subr.mxu0 0.0
        %322 = vmatpush1.msra.mxu0 0.0
        %323 = vmatprep.subr.mxu0 0.0
        %324 = vmatpush1.msra.mxu0 0.0
        %325 = vmatprep.subr.mxu0 0.0
        %326 = vmatpush1.msra.mxu0 0.0
        %327 = vmatprep.subr.mxu0 0.0
        %328 = vmatpush1.msra.mxu0 0.0
        %329 = vmatprep.subr.mxu0 0.0
        %330 = vmatpush1.msra.mxu0 0.0
        %331 = vmatprep.subr.mxu0 0.0
        %332 = vmatpush1.msra.mxu0 0.0
        %333 = vmatprep.subr.mxu0 0.0
        %334 = vmatpush1.msra.mxu0 0.0
        %335 = vmatprep.subr.mxu0 0.0
        %336 = vmatpush1.msra.mxu0 0.0
        %337 = vmatprep.subr.mxu0 0.0
        %v338 = vand.u32 %v209, 4294901760
        %v339 = vsub.f32 %v209, %v338
        %v340 = vand.u32 %v339, 4294901760
        %v341 = vsub.f32 %v339, %v340
        %v342 = vand.u32 %v341, 4294901760
        %343 = vmatpush1.msra.mxu0 %v342
        %344 = vmatprep.subr.mxu0 0.0
        %v345 = vand.u32 %v208, 4294901760
        %v346 = vsub.f32 %v208, %v345
        %v347 = vand.u32 %v346, 4294901760
        %v348 = vsub.f32 %v346, %v347
        %v349 = vand.u32 %v348, 4294901760
        %350 = vmatpush1.msra.mxu0 %v349
        %351 = vmatprep.subr.mxu0 0.0
        %v352 = vand.u32 %v207, 4294901760
        %v353 = vsub.f32 %v207, %v352
        %v354 = vand.u32 %v353, 4294901760
        %v355 = vsub.f32 %v353, %v354
        %v356 = vand.u32 %v355, 4294901760
        %357 = vmatpush1.msra.mxu0 %v356
        %358 = vmatprep.subr.mxu0 0.0
        %v359 = vand.u32 %v206, 4294901760
        %v360 = vsub.f32 %v206, %v359
        %v361 = vand.u32 %v360, 4294901760
        %v362 = vsub.f32 %v360, %v361
        %v363 = vand.u32 %v362, 4294901760
        %364 = vmatpush1.msra.mxu0 %v363
        %365 = vmatprep.subr.mxu0 0.0
        %366 = vmatpush2.msra.mxu0 0.0
        %367 = vmatprep.subr.mxu0 0.0
        %368 = vmatpush2.msra.mxu0 0.0
        %369 = vmatprep.subr.mxu0 0.0
        %370 = vmatpush2.msra.mxu0 0.0
        %371 = vmatprep.subr.mxu0 0.0
        %372 = vmatpush2.msra.mxu0 0.0
        %373 = vmatprep.subr.mxu0 0.0
        %374 = vmatpush2.msra.mxu0 0.0
        %375 = vmatprep.subr.mxu0 0.0
        %376 = vmatpush2.msra.mxu0 0.0
        %377 = vmatprep.subr.mxu0 0.0
        %378 = vmatpush2.msra.mxu0 0.0
        %379 = vmatprep.subr.mxu0 0.0
        %380 = vmatpush2.msra.mxu0 0.0
        %381 = vmatprep.subr.mxu0 0.0
        %382 = vmatpush2.msra.mxu0 0.0
        %383 = vmatprep.subr.mxu0 0.0
        %384 = vmatpush2.msra.mxu0 0.0
        %385 = vmatprep.subr.mxu0 0.0
        %386 = vmatpush2.msra.mxu0 0.0
        %387 = vmatprep.subr.mxu0 0.0
        %388 = vmatpush2.msra.mxu0 0.0
        %389 = vmatprep.subr.mxu0 0.0
        %390 = vmatpush2.msra.mxu0 0.0
        %391 = vmatprep.subr.mxu0 0.0
        %392 = vmatpush2.msra.mxu0 0.0
        %393 = vmatprep.subr.mxu0 0.0
        %394 = vmatpush2.msra.mxu0 0.0
        %395 = vmatprep.subr.mxu0 0.0
        %396 = vmatpush2.msra.mxu0 0.0
        %397 = vmatprep.mubr.f32.mxu0 0.0
        %v398 = vand.u32 %v219, 4294901760
        %399 = vmatmul.mubr.f32.gmra.mxu0 %v398
        %v400 = vpop.f32.mrf.mxu0
        %v401 = vadd.f32 %v300, %v400
        %v402 = vpop.f32.mrf.mxu0
        %403 = vmatprep.mubr.f32.mxu0 0.0
        %v404 = vand.u32 %v222, 4294901760
        %405 = vmatmul.mubr.f32.gmra.mxu0 %v404
        %v406 = vpop.f32.mrf.mxu0
        %v407 = vadd.f32 %v310, %v406
        %v408 = vpop.f32.mrf.mxu0
        %409 = vdwg.mxu0
        %410 = vmatprep.subr.mxu0 0.0
        %411 = vmatpush1.msra.mxu0 0.0
        %412 = vmatprep.subr.mxu0 0.0
        %413 = vmatpush1.msra.mxu0 0.0
        %414 = vmatprep.subr.mxu0 0.0
        %415 = vmatpush1.msra.mxu0 0.0
        %416 = vmatprep.subr.mxu0 0.0
        %417 = vmatpush1.msra.mxu0 0.0
        %418 = vmatprep.subr.mxu0 0.0
        %419 = vmatpush1.msra.mxu0 0.0
        %420 = vmatprep.subr.mxu0 0.0
        %421 = vmatpush1.msra.mxu0 0.0
        %422 = vmatprep.subr.mxu0 0.0
        %423 = vmatpush1.msra.mxu0 0.0
        %424 = vmatprep.subr.mxu0 0.0
        %425 = vmatpush1.msra.mxu0 0.0
        %426 = vmatprep.subr.mxu0 0.0
        %427 = vmatpush1.msra.mxu0 0.0
        %428 = vmatprep.subr.mxu0 0.0
        %429 = vmatpush1.msra.mxu0 0.0
        %430 = vmatprep.subr.mxu0 0.0
        %431 = vmatpush1.msra.mxu0 0.0
        %432 = vmatprep.subr.mxu0 0.0
        %433 = vmatpush1.msra.mxu0 0.0
        %434 = vmatprep.subr.mxu0 0.0
        %v435 = vand.u32 %v209, 4294901760
        %v436 = vsub.f32 %v209, %v435
        %437 = vmatpush1.msra.mxu0 %v436
        %438 = vmatprep.subr.mxu0 0.0
        %v439 = vand.u32 %v208, 4294901760
        %v440 = vsub.f32 %v208, %v439
        %441 = vmatpush1.msra.mxu0 %v440
        %442 = vmatprep.subr.mxu0 0.0
        %v443 = vand.u32 %v207, 4294901760
        %v444 = vsub.f32 %v207, %v443
        %445 = vmatpush1.msra.mxu0 %v444
        %446 = vmatprep.subr.mxu0 0.0
        %v447 = vand.u32 %v206, 4294901760
        %v448 = vsub.f32 %v206, %v447
        %449 = vmatpush1.msra.mxu0 %v448
        %450 = vmatprep.subr.mxu0 0.0
        %451 = vmatpush2.msra.mxu0 0.0
        %452 = vmatprep.subr.mxu0 0.0
        %453 = vmatpush2.msra.mxu0 0.0
        %454 = vmatprep.subr.mxu0 0.0
        %455 = vmatpush2.msra.mxu0 0.0
        %456 = vmatprep.subr.mxu0 0.0
        %457 = vmatpush2.msra.mxu0 0.0
        %458 = vmatprep.subr.mxu0 0.0
        %459 = vmatpush2.msra.mxu0 0.0
        %460 = vmatprep.subr.mxu0 0.0
        %461 = vmatpush2.msra.mxu0 0.0
        %462 = vmatprep.subr.mxu0 0.0
        %463 = vmatpush2.msra.mxu0 0.0
        %464 = vmatprep.subr.mxu0 0.0
        %465 = vmatpush2.msra.mxu0 0.0
        %466 = vmatprep.subr.mxu0 0.0
        %467 = vmatpush2.msra.mxu0 0.0
        %468 = vmatprep.subr.mxu0 0.0
        %469 = vmatpush2.msra.mxu0 0.0
        %470 = vmatprep.subr.mxu0 0.0
        %471 = vmatpush2.msra.mxu0 0.0
        %472 = vmatprep.subr.mxu0 0.0
        %473 = vmatpush2.msra.mxu0 0.0
        %474 = vmatprep.subr.mxu0 0.0
        %475 = vmatpush2.msra.mxu0 0.0
        %476 = vmatprep.subr.mxu0 0.0
        %477 = vmatpush2.msra.mxu0 0.0
        %478 = vmatprep.subr.mxu0 0.0
        %479 = vmatpush2.msra.mxu0 0.0
        %480 = vmatprep.subr.mxu0 0.0
        %481 = vmatpush2.msra.mxu0 0.0
        %482 = vmatprep.mubr.f32.mxu0 0.0
        %v483 = vand.u32 %v219, 4294901760
        %v484 = vsub.f32 %v219, %v483
        %485 = vmatmul.mubr.f32.gmra.mxu0 %v484
        %v486 = vpop.f32.mrf.mxu0
        %v487 = vadd.f32 %v401, %v486
        %v488 = vpop.f32.mrf.mxu0
        %489 = vmatprep.mubr.f32.mxu0 0.0
        %v490 = vand.u32 %v222, 4294901760
        %v491 = vsub.f32 %v222, %v490
        %492 = vmatmul.mubr.f32.gmra.mxu0 %v491
        %v493 = vpop.f32.mrf.mxu0
        %v494 = vadd.f32 %v407, %v493
        %v495 = vpop.f32.mrf.mxu0
        %496 = vdwg.mxu0
        %497 = vmatprep.subr.mxu0 0.0
        %498 = vmatpush1.msra.mxu0 0.0
        %499 = vmatprep.subr.mxu0 0.0
        %500 = vmatpush1.msra.mxu0 0.0
        %501 = vmatprep.subr.mxu0 0.0
        %502 = vmatpush1.msra.mxu0 0.0
        %503 = vmatprep.subr.mxu0 0.0
        %504 = vmatpush1.msra.mxu0 0.0
        %505 = vmatprep.subr.mxu0 0.0
        %506 = vmatpush1.msra.mxu0 0.0
        %507 = vmatprep.subr.mxu0 0.0
        %508 = vmatpush1.msra.mxu0 0.0
        %509 = vmatprep.subr.mxu0 0.0
        %510 = vmatpush1.msra.mxu0 0.0
        %511 = vmatprep.subr.mxu0 0.0
        %512 = vmatpush1.msra.mxu0 0.0
        %513 = vmatprep.subr.mxu0 0.0
        %514 = vmatpush1.msra.mxu0 0.0
        %515 = vmatprep.subr.mxu0 0.0
        %516 = vmatpush1.msra.mxu0 0.0
        %517 = vmatprep.subr.mxu0 0.0
        %518 = vmatpush1.msra.mxu0 0.0
        %519 = vmatprep.subr.mxu0 0.0
        %520 = vmatpush1.msra.mxu0 0.0
        %521 = vmatprep.subr.mxu0 0.0
        %v522 = vand.u32 %v209, 4294901760
        %523 = vmatpush1.msra.mxu0 %v522
        %524 = vmatprep.subr.mxu0 0.0
        %v525 = vand.u32 %v208, 4294901760
        %526 = vmatpush1.msra.mxu0 %v525
        %527 = vmatprep.subr.mxu0 0.0
        %v528 = vand.u32 %v207, 4294901760
        %529 = vmatpush1.msra.mxu0 %v528
        %530 = vmatprep.subr.mxu0 0.0
        %v531 = vand.u32 %v206, 4294901760
        %532 = vmatpush1.msra.mxu0 %v531
        %533 = vmatprep.subr.mxu0 0.0
        %534 = vmatpush2.msra.mxu0 0.0
        %535 = vmatprep.subr.mxu0 0.0
        %536 = vmatpush2.msra.mxu0 0.0
        %537 = vmatprep.subr.mxu0 0.0
        %538 = vmatpush2.msra.mxu0 0.0
        %539 = vmatprep.subr.mxu0 0.0
        %540 = vmatpush2.msra.mxu0 0.0
        %541 = vmatprep.subr.mxu0 0.0
        %542 = vmatpush2.msra.mxu0 0.0
        %543 = vmatprep.subr.mxu0 0.0
        %544 = vmatpush2.msra.mxu0 0.0
        %545 = vmatprep.subr.mxu0 0.0
        %546 = vmatpush2.msra.mxu0 0.0
        %547 = vmatprep.subr.mxu0 0.0
        %548 = vmatpush2.msra.mxu0 0.0
        %549 = vmatprep.subr.mxu0 0.0
        %550 = vmatpush2.msra.mxu0 0.0
        %551 = vmatprep.subr.mxu0 0.0
        %552 = vmatpush2.msra.mxu0 0.0
        %553 = vmatprep.subr.mxu0 0.0
        %554 = vmatpush2.msra.mxu0 0.0
        %555 = vmatprep.subr.mxu0 0.0
        %556 = vmatpush2.msra.mxu0 0.0
        %557 = vmatprep.subr.mxu0 0.0
        %558 = vmatpush2.msra.mxu0 0.0
        %559 = vmatprep.subr.mxu0 0.0
        %560 = vmatpush2.msra.mxu0 0.0
        %561 = vmatprep.subr.mxu0 0.0
        %562 = vmatpush2.msra.mxu0 0.0
        %563 = vmatprep.subr.mxu0 0.0
        %564 = vmatpush2.msra.mxu0 0.0
        %565 = vmatprep.mubr.f32.mxu0 0.0
        %v566 = vand.u32 %v219, 4294901760
        %v567 = vsub.f32 %v219, %v566
        %v568 = vand.u32 %v567, 4294901760
        %569 = vmatmul.mubr.f32.gmra.mxu0 %v568
        %v570 = vpop.f32.mrf.mxu0
        %v571 = vadd.f32 %v487, %v570
        %v572 = vpop.f32.mrf.mxu0
        %573 = vmatprep.mubr.f32.mxu0 0.0
        %v574 = vand.u32 %v222, 4294901760
        %v575 = vsub.f32 %v222, %v574
        %v576 = vand.u32 %v575, 4294901760
        %577 = vmatmul.mubr.f32.gmra.mxu0 %v576
        %v578 = vpop.f32.mrf.mxu0
        %v579 = vadd.f32 %v494, %v578
        %v580 = vpop.f32.mrf.mxu0
        %581 = vdwg.mxu0
        %582 = vmatprep.subr.mxu0 0.0
        %583 = vmatpush1.msra.mxu0 0.0
        %584 = vmatprep.subr.mxu0 0.0
        %585 = vmatpush1.msra.mxu0 0.0
        %586 = vmatprep.subr.mxu0 0.0
        %587 = vmatpush1.msra.mxu0 0.0
        %588 = vmatprep.subr.mxu0 0.0
        %589 = vmatpush1.msra.mxu0 0.0
        %590 = vmatprep.subr.mxu0 0.0
        %591 = vmatpush1.msra.mxu0 0.0
        %592 = vmatprep.subr.mxu0 0.0
        %593 = vmatpush1.msra.mxu0 0.0
        %594 = vmatprep.subr.mxu0 0.0
        %595 = vmatpush1.msra.mxu0 0.0
        %596 = vmatprep.subr.mxu0 0.0
        %597 = vmatpush1.msra.mxu0 0.0
        %598 = vmatprep.subr.mxu0 0.0
        %599 = vmatpush1.msra.mxu0 0.0
        %600 = vmatprep.subr.mxu0 0.0
        %601 = vmatpush1.msra.mxu0 0.0
        %602 = vmatprep.subr.mxu0 0.0
        %603 = vmatpush1.msra.mxu0 0.0
        %604 = vmatprep.subr.mxu0 0.0
        %605 = vmatpush1.msra.mxu0 0.0
        %606 = vmatprep.subr.mxu0 0.0
        %v607 = vand.u32 %v209, 4294901760
        %v608 = vsub.f32 %v209, %v607
        %v609 = vand.u32 %v608, 4294901760
        %610 = vmatpush1.msra.mxu0 %v609
        %611 = vmatprep.subr.mxu0 0.0
        %v612 = vand.u32 %v208, 4294901760
        %v613 = vsub.f32 %v208, %v612
        %v614 = vand.u32 %v613, 4294901760
        %615 = vmatpush1.msra.mxu0 %v614
        %616 = vmatprep.subr.mxu0 0.0
        %v617 = vand.u32 %v207, 4294901760
        %v618 = vsub.f32 %v207, %v617
        %v619 = vand.u32 %v618, 4294901760
        %620 = vmatpush1.msra.mxu0 %v619
        %621 = vmatprep.subr.mxu0 0.0
        %v622 = vand.u32 %v206, 4294901760
        %v623 = vsub.f32 %v206, %v622
        %v624 = vand.u32 %v623, 4294901760
        %625 = vmatpush1.msra.mxu0 %v624
        %626 = vmatprep.subr.mxu0 0.0
        %627 = vmatpush2.msra.mxu0 0.0
        %628 = vmatprep.subr.mxu0 0.0
        %629 = vmatpush2.msra.mxu0 0.0
        %630 = vmatprep.subr.mxu0 0.0
        %631 = vmatpush2.msra.mxu0 0.0
        %632 = vmatprep.subr.mxu0 0.0
        %633 = vmatpush2.msra.mxu0 0.0
        %634 = vmatprep.subr.mxu0 0.0
        %635 = vmatpush2.msra.mxu0 0.0
        %636 = vmatprep.subr.mxu0 0.0
        %637 = vmatpush2.msra.mxu0 0.0
        %638 = vmatprep.subr.mxu0 0.0
        %639 = vmatpush2.msra.mxu0 0.0
        %640 = vmatprep.subr.mxu0 0.0
        %641 = vmatpush2.msra.mxu0 0.0
        %642 = vmatprep.subr.mxu0 0.0
        %643 = vmatpush2.msra.mxu0 0.0
        %644 = vmatprep.subr.mxu0 0.0
        %645 = vmatpush2.msra.mxu0 0.0
        %646 = vmatprep.subr.mxu0 0.0
        %647 = vmatpush2.msra.mxu0 0.0
        %648 = vmatprep.subr.mxu0 0.0
        %649 = vmatpush2.msra.mxu0 0.0
        %650 = vmatprep.subr.mxu0 0.0
        %651 = vmatpush2.msra.mxu0 0.0
        %652 = vmatprep.subr.mxu0 0.0
        %653 = vmatpush2.msra.mxu0 0.0
        %654 = vmatprep.subr.mxu0 0.0
        %655 = vmatpush2.msra.mxu0 0.0
        %656 = vmatprep.subr.mxu0 0.0
        %657 = vmatpush2.msra.mxu0 0.0
        %658 = vmatprep.mubr.f32.mxu0 0.0
        %v659 = vand.u32 %v219, 4294901760
        %660 = vmatmul.mubr.f32.gmra.mxu0 %v659
        %v661 = vpop.f32.mrf.mxu0
        %v662 = vadd.f32 %v571, %v661
        %v663 = vpop.f32.mrf.mxu0
        %664 = vmatprep.mubr.f32.mxu0 0.0
        %v665 = vand.u32 %v222, 4294901760
        %666 = vmatmul.mubr.f32.gmra.mxu0 %v665
        %v667 = vpop.f32.mrf.mxu0
        %v668 = vadd.f32 %v579, %v667
        %v669 = vpop.f32.mrf.mxu0
        %670 = vdwg.mxu0
        %671 = vmatprep.subr.mxu0 0.0
        %672 = vmatpush1.msra.mxu0 0.0
        %673 = vmatprep.subr.mxu0 0.0
        %674 = vmatpush1.msra.mxu0 0.0
        %675 = vmatprep.subr.mxu0 0.0
        %676 = vmatpush1.msra.mxu0 0.0
        %677 = vmatprep.subr.mxu0 0.0
        %678 = vmatpush1.msra.mxu0 0.0
        %679 = vmatprep.subr.mxu0 0.0
        %680 = vmatpush1.msra.mxu0 0.0
        %681 = vmatprep.subr.mxu0 0.0
        %682 = vmatpush1.msra.mxu0 0.0
        %683 = vmatprep.subr.mxu0 0.0
        %684 = vmatpush1.msra.mxu0 0.0
        %685 = vmatprep.subr.mxu0 0.0
        %686 = vmatpush1.msra.mxu0 0.0
        %687 = vmatprep.subr.mxu0 0.0
        %688 = vmatpush1.msra.mxu0 0.0
        %689 = vmatprep.subr.mxu0 0.0
        %690 = vmatpush1.msra.mxu0 0.0
        %691 = vmatprep.subr.mxu0 0.0
        %692 = vmatpush1.msra.mxu0 0.0
        %693 = vmatprep.subr.mxu0 0.0
        %694 = vmatpush1.msra.mxu0 0.0
        %695 = vmatprep.subr.mxu0 0.0
        %v696 = vand.u32 %v209, 4294901760
        %697 = vmatpush1.msra.mxu0 %v696
        %698 = vmatprep.subr.mxu0 0.0
        %v699 = vand.u32 %v208, 4294901760
        %700 = vmatpush1.msra.mxu0 %v699
        %701 = vmatprep.subr.mxu0 0.0
        %v702 = vand.u32 %v207, 4294901760
        %703 = vmatpush1.msra.mxu0 %v702
        %704 = vmatprep.subr.mxu0 0.0
        %v705 = vand.u32 %v206, 4294901760
        %706 = vmatpush1.msra.mxu0 %v705
        %707 = vmatprep.subr.mxu0 0.0
        %708 = vmatpush2.msra.mxu0 0.0
        %709 = vmatprep.subr.mxu0 0.0
        %710 = vmatpush2.msra.mxu0 0.0
        %711 = vmatprep.subr.mxu0 0.0
        %712 = vmatpush2.msra.mxu0 0.0
        %713 = vmatprep.subr.mxu0 0.0
        %714 = vmatpush2.msra.mxu0 0.0
        %715 = vmatprep.subr.mxu0 0.0
        %716 = vmatpush2.msra.mxu0 0.0
        %717 = vmatprep.subr.mxu0 0.0
        %718 = vmatpush2.msra.mxu0 0.0
        %719 = vmatprep.subr.mxu0 0.0
        %720 = vmatpush2.msra.mxu0 0.0
        %721 = vmatprep.subr.mxu0 0.0
        %722 = vmatpush2.msra.mxu0 0.0
        %723 = vmatprep.subr.mxu0 0.0
        %724 = vmatpush2.msra.mxu0 0.0
        %725 = vmatprep.subr.mxu0 0.0
        %726 = vmatpush2.msra.mxu0 0.0
        %727 = vmatprep.subr.mxu0 0.0
        %728 = vmatpush2.msra.mxu0 0.0
        %729 = vmatprep.subr.mxu0 0.0
        %730 = vmatpush2.msra.mxu0 0.0
        %731 = vmatprep.subr.mxu0 0.0
        %732 = vmatpush2.msra.mxu0 0.0
        %733 = vmatprep.subr.mxu0 0.0
        %734 = vmatpush2.msra.mxu0 0.0
        %735 = vmatprep.subr.mxu0 0.0
        %736 = vmatpush2.msra.mxu0 0.0
        %737 = vmatprep.subr.mxu0 0.0
        %738 = vmatpush2.msra.mxu0 0.0
        %739 = vmatprep.mubr.f32.mxu0 0.0
        %v740 = vand.u32 %v219, 4294901760
        %741 = vmatmul.mubr.f32.gmra.mxu0 %v740
        %v742 = vpop.f32.mrf.mxu0
        %v743 = vadd.f32 %v662, %v742
        %v744 = vpop.f32.mrf.mxu0
        %745 = vmatprep.mubr.f32.mxu0 0.0
        %v746 = vand.u32 %v222, 4294901760
        %747 = vmatmul.mubr.f32.gmra.mxu0 %v746
        %v748 = vpop.f32.mrf.mxu0
        %v749 = vadd.f32 %v668, %v748
        %v750 = vpop.f32.mrf.mxu0
        %751 = vdwg.mxu0
        %v752 = vadd.f32 %v204, %v743
        %v753 = vadd.f32 %v205, %v749
        %754 = vst.msk [vmem:[%s203] sm:$0xff] %vm217, %v752
        %755 = vst.msk [vmem:[%s203 + $0x8] sm:$0xff] %vm217, %v753
        %s756 = sand.u32 %s97, 1
        %s757 = scalar_lea.sflag [#allocation4], %s756
        %s758 = sand.u32 %s97, 1
        %s759 = smul.addr %s758, 16
        %s760 = scalar_lea.vmem [#allocation7], %s759
        // Predicated region
        $region41: #{tpu_custom_call.1} parent=31 // pred_check
          %p761 = pneg %p107
        $region42: #{tpu_custom_call.1} parent=31 // pred_check_branch
          %763 = sbr.rel (%p761) target = $region44
        $region43: #{tpu_custom_call.1} parent=31 // pred_region
          %s765 = ssub.s32 256, 256
          %766 = vsyncadd %s757, %s765
          %s767 = smul.addr %s21, 2
          %s768 = smul.addr %s767, 128
          %s769 = scalar_lea.hbm %s3, %s768
          %s770 = sshll.u32 %s760, 4
          %s771 = int_to_ptr.vmem [resolvable:$true] %s770
          %776 = dma.vmem_to_hbm [thread:$0]  %s771, 256, %s769, %s757, 128, 128, 8
        $region44: #{tpu_custom_call.1} parent=31 // pred_fallthru
          _
      $region32: #{tpu_custom_call.1} parent=5 // pred_fallthru
        _
      %p777 = scmp.le.s32.totalorder 2, %s16
      // Predicated region
      $region45: #{tpu_custom_call.1} parent=5 // pred_check
        %p778 = pneg %p777
      $region46: #{tpu_custom_call.1} parent=5 // pred_check_branch
        %780 = sbr.rel (%p778) target = $region48
      $region47: #{tpu_custom_call.1} parent=5 // pred_region
        %s781 = ssub.s32 %s16, 2
        // Predicated region
        $region49: #{tpu_custom_call.1} parent=47 // pred_check
          %p782 = pneg %p113
        $region50: #{tpu_custom_call.1} parent=47 // pred_check_branch
          %784 = sbr.rel (%p782) target = $region52
        $region51: #{tpu_custom_call.1} parent=47 // pred_region
          %s785 = sand.u32 %s98, 1
          %s786 = scalar_lea.sflag [#allocation4], %s785
          %s787 = sand.u32 %s98, 1
          %s788 = smul.addr %s787, 16
          %s789 = scalar_lea.vmem [#allocation7], %s788
          %790 = dma.done %s786, 256
        $region52: #{tpu_custom_call.1} parent=47 // pred_fallthru
          _
      $region48: #{tpu_custom_call.1} parent=5 // pred_fallthru
        _
    $region6: #{tpu_custom_call.1} parent=1 // loop_footer
      %s20 = sadd.s32 1, %s16
    $region7: #{tpu_custom_call.1} parent=1 // loop_footer_branch
      %15 = sbr.rel target = $region3
    $region8: #{tpu_custom_call.1} parent=1 // loop_exit
      _
    %791 = vsyncpa [#allocation3], 1
    %s792 = scalar_lea.sflag [#allocation3], 1
    %793 = vsyncpa %s792, 1
    %794 = vsyncpa [#allocation6], 1
    %795 = vsyncpa [#allocation4], 1
    %s796 = scalar_lea.sflag [#allocation4], 1
    %797 = vsyncpa %s796, 1

</llo_original>
